<compile_context>
chip_gen: v7x
topology: tpu7x:2x2x1
jax: 0.10.0
libtpu: 0.0.40
codegen_flags: <defaults>
</compile_context>

<pallas_src>
import functools

import jax
import jax.numpy as jnp
from jax.experimental import pallas as pl
from jax.experimental.pallas import tpu as pltpu

_NEG_BIG = -1e30  # finite "minus infinity": avoids inf-inf NaNs, exp() -> 0


def _round_up(a: int, b: int) -> int:
    return ((a + b - 1) // b) * b


def _cdiv(a: int, b: int) -> int:
    return (a + b - 1) // b


# ---------------------------------------------------------------------------
# Pass 1: online row-wise log-sum-exp over vocab tiles.
#   x_ref: (tile_m, D) bf16    w_ref: (tile_v, D) bf16    b_ref: (1, tile_v) f32
#   outputs: lse (tile_m, 1) f32 resident block; optionally bf16 logits tile.
#   m_sc / s_sc: (tile_m, 1) f32 VMEM scratch accumulators.
# ---------------------------------------------------------------------------
def _pass1_kernel(x_ref, w_ref, b_ref, *refs, v_total, tile_v, cache):
    if cache:
        lse_ref, logits_ref, m_sc, s_sc = refs
    else:
        lse_ref, m_sc, s_sc = refs
        logits_ref = None

    j = pl.program_id(1)

    @pl.when(j == 0)
    def _():
        m_sc[...] = jnp.full_like(m_sc, _NEG_BIG)
        s_sc[...] = jnp.zeros_like(s_sc)

    # (tile_m, D) . (tile_v, D)^T -> (tile_m, tile_v); trailing-dim contraction
    # keeps the torch (V, D) weight layout (no host-side transpose).
    logits = jnp.einsum("md,vd->mv", x_ref[...], w_ref[...],
                        preferred_element_type=jnp.float32) + b_ref[...]

    if v_total % tile_v != 0:
        # Mask out-of-range vocab columns of the last (partial) tile so OOB
        # weight/bias reads cannot pollute the row max / sum-exp.
        col = j * tile_v + jax.lax.broadcasted_iota(jnp.int32, logits.shape, 1)
        logits = jnp.where(col < v_total, logits, _NEG_BIG)

    if cache:
        logits_ref[...] = logits.astype(logits_ref.dtype)

    m_prev = m_sc[...]
    m_new = jnp.maximum(m_prev, jnp.max(logits, axis=-1, keepdims=True))
    s_sc[...] = (s_sc[...] * jnp.exp(m_prev - m_new)
                 + jnp.sum(jnp.exp(logits - m_new), axis=-1, keepdims=True))
    m_sc[...] = m_new

    @pl.when(j == pl.num_programs(1) - 1)
    def _():
        lse_ref[...] = m_sc[...] + jnp.log(s_sc[...])


# ---------------------------------------------------------------------------
# Pass 2a (small D): recompute the logits tile and emit exp(logits - lse).
# ---------------------------------------------------------------------------
def _pass2_recompute_kernel(x_ref, w_ref, b_ref, lse_ref, o_ref):
    logits = jnp.einsum("md,vd->mv", x_ref[...], w_ref[...],
                        preferred_element_type=jnp.float32) + b_ref[...]
    o_ref[...] = jnp.exp(logits - lse_ref[...]).astype(o_ref.dtype)


# ---------------------------------------------------------------------------
# Pass 2b (large D): pure elementwise rescale of cached bf16 logits.
# ---------------------------------------------------------------------------
def _pass2_rescale_kernel(logits_ref, lse_ref, o_ref):
    o_ref[...] = jnp.exp(logits_ref[...].astype(jnp.float32)
                         - lse_ref[...]).astype(o_ref.dtype)


@functools.partial(jax.jit, static_argnames=("tile_m", "tile_v", "cache_logits"))
def mlm_task_layer(x, weight, bias, *, tile_m=512, tile_v=1024, cache_logits=None):
    """softmax(x @ weight.T + bias, axis=-1).

    x:      (B, S, D) float32
    weight: (V, D)    float32   (torch nn.Linear .weight layout)
    bias:   (V,)      float32
    returns (B, S, V) in x.dtype
    """
    B, S, D = x.shape
    V = weight.shape[0]
    M = B * S

    if cache_logits is None:
        # Recomputing the matmul in pass 2 is only cheaper than caching bf16
        # logits when D is small (HBM-write bound); at D >= ~512 the second
        # matmul + weight re-streaming would dominate (MXU-bound regime).
        cache_logits = D >= 512

    # --- tile sizing (clamped for small problems, TPU-friendly multiples) ---
    tile_m = min(tile_m, _round_up(M, 16))
    tile_v = min(tile_v, _round_up(V, 128))
    if M >= 2 * 128:
        # Keep at least 2 row tiles so the "parallel" M axis can shard across
        # TensorCores on multi-TC chips (v7x); irrelevant for tiny M.
        tile_m = min(tile_m, _round_up(_cdiv(M, 2), 16))

    def vmem_need(tm, tv):
        x_blk, w_blk, b_blk = tm * D * 2, tv * D * 2, tv * 4
        out_blk, log_blk, lse_blk = tm * tv * 4, tm * tv * 2, tm * 4
        p1 = 2 * (x_blk + w_blk + b_blk + lse_blk
                  + (log_blk if cache_logits else 0)) + 2 * lse_blk
        p2 = (2 * (log_blk + lse_blk + out_blk) if cache_logits
              else 2 * (x_blk + w_blk + b_blk + lse_blk + out_blk))
        return max(p1, p2)

    VMEM_BUDGET = 44 * 1024 * 1024  # leaves headroom inside v7x's 64 MiB/TC
    while vmem_need(tile_m, tile_v) > VMEM_BUDGET and (tile_v > 128 or tile_m > 16):
        if tile_v > 128:
            tile_v = max(128, _round_up(tile_v // 2, 128))
        else:
            tile_m = max(16, _round_up(tile_m // 2, 16))
    vmem_limit = min(vmem_need(tile_m, tile_v) + (8 << 20), 100 * 1024 * 1024)

    m_tiles = _cdiv(M, tile_m)
    v_tiles = _cdiv(V, tile_v)
    V_pad = v_tiles * tile_v

    # ---- host-side prep: only reshape + bf16 cast (no transpose, no pad) ----
    x2 = x.reshape(M, D).astype(jnp.bfloat16)   # bf16 MXU operands, f32 accum
    w_bf = weight.astype(jnp.bfloat16)          # (V, D), torch layout
    b2 = bias.astype(jnp.float32).reshape(1, V)

    # -------------------- pass 1: per-row lse over V tiles -------------------
    p1_kernel = functools.partial(_pass1_kernel, v_total=V, tile_v=tile_v,
                                  cache=cache_logits)
    if cache_logits:
        out_shape1 = (jax.ShapeDtypeStruct((M, 1), jnp.float32),
                      jax.ShapeDtypeStruct((M, V_pad), jnp.bfloat16))
        out_specs1 = (pl.BlockSpec((tile_m, 1), lambda i, j: (i, 0)),
                      pl.BlockSpec((tile_m, tile_v), lambda i, j: (i, j)))
    else:
        out_shape1 = jax.ShapeDtypeStruct((M, 1), jnp.float32)
        out_specs1 = pl.BlockSpec((tile_m, 1), lambda i, j: (i, 0))

    res1 = pl.pallas_call(
        p1_kernel,
        out_shape=out_shape1,
        grid_spec=pltpu.PrefetchScalarGridSpec(
            num_scalar_prefetch=0,
            grid=(m_tiles, v_tiles),
            in_specs=[
                pl.BlockSpec((tile_m, D), lambda i, j: (i, 0)),   # x rows
                pl.BlockSpec((tile_v, D), lambda i, j: (j, 0)),   # weight V-tile
                pl.BlockSpec((1, tile_v), lambda i, j: (0, j)),   # bias V-tile
            ],
            out_specs=out_specs1,
            scratch_shapes=[pltpu.VMEM((tile_m, 1), jnp.float32),   # running max
                            pltpu.VMEM((tile_m, 1), jnp.float32)],  # running sum
        ),
        compiler_params=pltpu.CompilerParams(
            dimension_semantics=("parallel", "arbitrary"),
            vmem_limit_bytes=vmem_limit),
    )(x2, w_bf, b2)
    lse, logits_cache = res1 if cache_logits else (res1, None)

    # -------------------- pass 2: normalized probabilities -------------------
    out_shape2 = jax.ShapeDtypeStruct((M, V), x.dtype)

    if cache_logits:
        out = pl.pallas_call(
            _pass2_rescale_kernel,
            out_shape=out_shape2,
            grid_spec=pltpu.PrefetchScalarGridSpec(
                num_scalar_prefetch=0,
                grid=(m_tiles, v_tiles),
                in_specs=[
                    pl.BlockSpec((tile_m, tile_v), lambda i, j: (i, j)),
                    pl.BlockSpec((tile_m, 1), lambda i, j: (i, 0)),
                ],
                out_specs=pl.BlockSpec((tile_m, tile_v), lambda i, j: (i, j)),
            ),
            compiler_params=pltpu.CompilerParams(
                dimension_semantics=("parallel", "parallel"),
                vmem_limit_bytes=vmem_limit),
        )(logits_cache, lse)
    else:
        # Put the axis with the larger tile on the outer grid position so the
        # streamed operand (the other axis's blocks) is re-fetched least.
        if tile_v >= tile_m:
            grid2 = (v_tiles, m_tiles)
            x_map = lambda j, i: (i, 0)
            w_map = lambda j, i: (j, 0)
            b_map = lambda j, i: (0, j)
            lse_map = lambda j, i: (i, 0)
            o_map = lambda j, i: (i, j)
        else:
            grid2 = (m_tiles, v_tiles)
            x_map = lambda i, j: (i, 0)
            w_map = lambda i, j: (j, 0)
            b_map = lambda i, j: (0, j)
            lse_map = lambda i, j: (i, 0)
            o_map = lambda i, j: (i, j)
        out = pl.pallas_call(
            _pass2_recompute_kernel,
            out_shape=out_shape2,
            grid_spec=pltpu.PrefetchScalarGridSpec(
                num_scalar_prefetch=0,
                grid=grid2,
                in_specs=[
                    pl.BlockSpec((tile_m, D), x_map),
                    pl.BlockSpec((tile_v, D), w_map),
                    pl.BlockSpec((1, tile_v), b_map),
                    pl.BlockSpec((tile_m, 1), lse_map),
                ],
                out_specs=pl.BlockSpec((tile_m, tile_v), o_map),
            ),
            compiler_params=pltpu.CompilerParams(
                dimension_semantics=("parallel", "parallel"),
                vmem_limit_bytes=vmem_limit),
        )(x2, w_bf, b2, lse)

    return out.reshape(B, S, V)


if __name__ == "__main__":
    # ---- test 1: small shapes, tiles forced small so grid is (2, 2) and the
    #      online V-reduction + recompute pass are actually exercised. ----
    B, S, D, V = 2, 16, 32, 256
    key = jax.random.PRNGKey(0)
    kx, kw, kb = jax.random.split(key, 3)

    x = jax.random.normal(kx, (B, S, D), dtype=jnp.float32)
    weight = jax.random.normal(kw, (V, D), dtype=jnp.float32) * 0.05  # (V, D)
    bias = jax.random.normal(kb, (V,), dtype=jnp.float32) * 0.05

    ref = jax.nn.softmax(jnp.einsum("bsd,vd->bsv", x, weight) + bias, axis=-1)

    out = jax.block_until_ready(mlm_task_layer(x, weight, bias,
                                               tile_m=16, tile_v=128))
    assert out.shape == (B, S, V)
    assert jnp.allclose(out, ref, atol=1e-2, rtol=1e-2)
    assert jnp.allclose(jnp.sum(out, axis=-1), 1.0, atol=1e-3)

    # ---- test 1b: same shapes but force the cached-logits path (used by
    #      default for large D). ----
    out_c = jax.block_until_ready(mlm_task_layer(x, weight, bias,
                                                 tile_m=16, tile_v=128,
                                                 cache_logits=True))
    assert jnp.allclose(out_c, ref, atol=1e-2, rtol=1e-2)
    assert jnp.allclose(jnp.sum(out_c, axis=-1), 1.0, atol=1e-3)

    # ---- test 2: ragged shapes (M and V not tile-aligned) with default
    #      large tiles, exercising the ceil-grid / masking path. ----
    B2, S2, D2, V2 = 2, 5, 32, 200
    kx2, kw2, kb2 = jax.random.split(jax.random.PRNGKey(1), 3)
    x2 = jax.random.normal(kx2, (B2, S2, D2), dtype=jnp.float32)
    w2 = jax.random.normal(kw2, (V2, D2), dtype=jnp.float32) * 0.05
    b2 = jax.random.normal(kb2, (V2,), dtype=jnp.float32) * 0.05

    ref2 = jax.nn.softmax(jnp.einsum("bsd,vd->bsv", x2, w2) + b2, axis=-1)
    out2 = jax.block_until_ready(mlm_task_layer(x2, w2, b2))
    assert out2.shape == (B2, S2, V2)
    assert jnp.allclose(out2, ref2, atol=1e-2, rtol=1e-2)
    assert jnp.allclose(jnp.sum(out2, axis=-1), 1.0, atol=1e-3)

    out2c = jax.block_until_ready(mlm_task_layer(x2, w2, b2, cache_logits=True))
    assert jnp.allclose(out2c, ref2, atol=1e-2, rtol=1e-2)

    print("KERNEL_OK")
</pallas_src>

<mosaic_0001>
module attributes {stable_mosaic.version = 11 : i64} {
  func.func @_pass2_recompute_kernel(%arg0: i32, %arg1: i32, %arg2: memref<16x32xbf16, #tpu.memory_space<vmem>>, %arg3: memref<128x32xbf16, #tpu.memory_space<vmem>>, %arg4: memref<1x128xf32, #tpu.memory_space<vmem>>, %arg5: memref<16x1xf32, #tpu.memory_space<vmem>>, %arg6: memref<16x128xf32, #tpu.memory_space<vmem>>) attributes {dimension_semantics = [#tpu.dimension_semantics<parallel>, #tpu.dimension_semantics<parallel>], iteration_bounds = array<i64: 2, 2>, scalar_prefetch = 0 : i64, scratch_operands = 0 : i64, tpu.core_type = #tpu.core_type<tc>, window_params = [{transform_indices = @transform_0, window_bounds = array<i64: 16, 32>}, {transform_indices = @transform_1, window_bounds = array<i64: 128, 32>}, {transform_indices = @transform_2, window_bounds = array<i64: 1, 128>}, {transform_indices = @transform_3, window_bounds = array<i64: 16, 1>}, {transform_indices = @transform_4, window_bounds = array<i64: 16, 128>}]} {
    %c0 = arith.constant 0 : index
    %c0_0 = arith.constant 0 : index
    %0 = vector.load %arg2[%c0, %c0_0] : memref<16x32xbf16, #tpu.memory_space<vmem>>, vector<16x32xbf16>
    %c0_1 = arith.constant 0 : index
    %c0_2 = arith.constant 0 : index
    %1 = vector.load %arg3[%c0_1, %c0_2] : memref<128x32xbf16, #tpu.memory_space<vmem>>, vector<128x32xbf16>
    "tpu.trace_start"() <{level = 10 : i32, message = "md,vd->mv"}> : () -> ()
    %cst = arith.constant dense<0.000000e+00> : vector<16x128xf32>
    %2 = tpu.matmul %0, %1, %cst {dimension_numbers = #tpu.dot_dimension_numbers<[1], [1], [0], [0], [0, 0, 1, 0], [], []>} : vector<16x32xbf16>, vector<128x32xbf16>, vector<16x128xf32> -> vector<16x128xf32>
    "tpu.trace_stop"() : () -> ()
    %c0_3 = arith.constant 0 : index
    %c0_4 = arith.constant 0 : index
    %3 = vector.load %arg4[%c0_3, %c0_4] : memref<1x128xf32, #tpu.memory_space<vmem>>, vector<1x128xf32>
    %4 = vector.broadcast %3 : vector<1x128xf32> to vector<16x128xf32>
    %5 = arith.addf %2, %4 : vector<16x128xf32>
    %c0_5 = arith.constant 0 : index
    %c0_6 = arith.constant 0 : index
    %6 = vector.load %arg5[%c0_5, %c0_6] : memref<16x1xf32, #tpu.memory_space<vmem>>, vector<16x1xf32>
    %7 = vector.broadcast %6 : vector<16x1xf32> to vector<16x128xf32>
    %8 = arith.subf %5, %7 : vector<16x128xf32>
    %9 = math.exp %8 : vector<16x128xf32>
    %c0_7 = arith.constant 0 : index
    %c0_8 = arith.constant 0 : index
    %10 = vector.load %arg6[%c0_7, %c0_8] : memref<16x128xf32, #tpu.memory_space<vmem>>, vector<16x128xf32>
    tpu.vector_store %arg6[%c0_7, %c0_8], %9 {strides = array<i32>} : memref<16x128xf32, #tpu.memory_space<vmem>>, vector<16x128xf32>,
    return
  }
  func.func @transform_0(%arg0: i32, %arg1: i32) -> (i32, i32) {
    %c0_i32 = arith.constant 0 : i32
    %c0_i32_0 = arith.constant 0 : i32
    return %arg1, %c0_i32 : i32, i32
  }
  func.func @transform_1(%arg0: i32, %arg1: i32) -> (i32, i32) {
    %c0_i32 = arith.constant 0 : i32
    %c0_i32_0 = arith.constant 0 : i32
    return %arg0, %c0_i32 : i32, i32
  }
  func.func @transform_2(%arg0: i32, %arg1: i32) -> (i32, i32) {
    %c0_i32 = arith.constant 0 : i32
    %c0_i32_0 = arith.constant 0 : i32
    return %c0_i32, %arg0 : i32, i32
  }
  func.func @transform_3(%arg0: i32, %arg1: i32) -> (i32, i32) {
    %c0_i32 = arith.constant 0 : i32
    %c0_i32_0 = arith.constant 0 : i32
    return %arg1, %c0_i32 : i32, i32
  }
  func.func @transform_4(%arg0: i32, %arg1: i32) -> (i32, i32) {
    %c0_i32 = arith.constant 0 : i32
    return %arg1, %arg0 : i32, i32
  }
}

module attributes {stable_mosaic.version = 11 : i64} {
  func.func @_pass1_kernel(%arg0: i32, %arg1: i32, %arg2: memref<16x32xbf16, #tpu.memory_space<vmem>>, %arg3: memref<128x32xbf16, #tpu.memory_space<vmem>>, %arg4: memref<1x128xf32, #tpu.memory_space<vmem>>, %arg5: memref<16x1xf32, #tpu.memory_space<vmem>>, %arg6: memref<16x1xf32, #tpu.memory_space<vmem>>, %arg7: memref<16x1xf32, #tpu.memory_space<vmem>>) attributes {dimension_semantics = [#tpu.dimension_semantics<parallel>, #tpu.dimension_semantics<arbitrary>], iteration_bounds = array<i64: 2, 2>, scalar_prefetch = 0 : i64, scratch_operands = 2 : i64, tpu.core_type = #tpu.core_type<tc>, window_params = [{transform_indices = @transform_0, window_bounds = array<i64: 16, 32>}, {transform_indices = @transform_1, window_bounds = array<i64: 128, 32>}, {transform_indices = @transform_2, window_bounds = array<i64: 1, 128>}, {transform_indices = @transform_3, window_bounds = array<i64: 16, 1>}]} {
    %c0_i32 = arith.constant 0 : i32
    %0 = arith.cmpi eq, %arg1, %c0_i32 : i32
    %1 = arith.extui %0 : i1 to i32
    %c0_i32_0 = arith.constant 0 : i32
    %2 = arith.cmpi ne, %1, %c0_i32_0 : i32
    scf.if %2 {
      %cst_17 = arith.constant -1.000000e+30 : f32
      %28 = vector.broadcast %cst_17 : f32 to vector<16x1xf32>
      %c0_18 = arith.constant 0 : index
      %c0_19 = arith.constant 0 : index
      %29 = vector.load %arg6[%c0_18, %c0_19] : memref<16x1xf32, #tpu.memory_space<vmem>>, vector<16x1xf32>
      tpu.vector_store %arg6[%c0_18, %c0_19], %28 {strides = array<i32>} : memref<16x1xf32, #tpu.memory_space<vmem>>, vector<16x1xf32>,
      %cst_20 = arith.constant 0.000000e+00 : f32
      %30 = vector.broadcast %cst_20 : f32 to vector<16x1xf32>
      %c0_21 = arith.constant 0 : index
      %c0_22 = arith.constant 0 : index
      %31 = vector.load %arg7[%c0_21, %c0_22] : memref<16x1xf32, #tpu.memory_space<vmem>>, vector<16x1xf32>
      tpu.vector_store %arg7[%c0_21, %c0_22], %30 {strides = array<i32>} : memref<16x1xf32, #tpu.memory_space<vmem>>, vector<16x1xf32>,
    } else {
    }
    %c0 = arith.constant 0 : index
    %c0_1 = arith.constant 0 : index
    %3 = vector.load %arg2[%c0, %c0_1] : memref<16x32xbf16, #tpu.memory_space<vmem>>, vector<16x32xbf16>
    %c0_2 = arith.constant 0 : index
    %c0_3 = arith.constant 0 : index
    %4 = vector.load %arg3[%c0_2, %c0_3] : memref<128x32xbf16, #tpu.memory_space<vmem>>, vector<128x32xbf16>
    "tpu.trace_start"() <{level = 10 : i32, message = "md,vd->mv"}> : () -> ()
    %cst = arith.constant dense<0.000000e+00> : vector<16x128xf32>
    %5 = tpu.matmul %3, %4, %cst {dimension_numbers = #tpu.dot_dimension_numbers<[1], [1], [0], [0], [0, 0, 1, 0], [], []>} : vector<16x32xbf16>, vector<128x32xbf16>, vector<16x128xf32> -> vector<16x128xf32>
    "tpu.trace_stop"() : () -> ()
    %c0_4 = arith.constant 0 : index
    %c0_5 = arith.constant 0 : index
    %6 = vector.load %arg4[%c0_4, %c0_5] : memref<1x128xf32, #tpu.memory_space<vmem>>, vector<1x128xf32>
    %7 = vector.broadcast %6 : vector<1x128xf32> to vector<16x128xf32>
    %8 = arith.addf %5, %7 : vector<16x128xf32>
    %c0_6 = arith.constant 0 : index
    %c0_7 = arith.constant 0 : index
    %9 = vector.load %arg6[%c0_6, %c0_7] : memref<16x1xf32, #tpu.memory_space<vmem>>, vector<16x1xf32>
    %cst_8 = arith.constant dense<0xFF800000> : vector<16xf32>
    %10 = vector.multi_reduction <maximumf>, %8, %cst_8 [1] : vector<16x128xf32> to vector<16xf32>
    %11 = vector.shape_cast %10 : vector<16xf32> to vector<16x1xf32>
    %12 = arith.maximumf %9, %11 : vector<16x1xf32>
    %c0_9 = arith.constant 0 : index
    %c0_10 = arith.constant 0 : index
    %13 = vector.load %arg7[%c0_9, %c0_10] : memref<16x1xf32, #tpu.memory_space<vmem>>, vector<16x1xf32>
    %14 = arith.subf %9, %12 : vector<16x1xf32>
    %15 = math.exp %14 : vector<16x1xf32>
    %16 = arith.mulf %13, %15 : vector<16x1xf32>
    %17 = vector.broadcast %12 : vector<16x1xf32> to vector<16x128xf32>
    %18 = arith.subf %8, %17 : vector<16x128xf32>
    %19 = math.exp %18 : vector<16x128xf32>
    %cst_11 = arith.constant dense<0.000000e+00> : vector<16xf32>
    %20 = vector.multi_reduction <add>, %19, %cst_11 [1] : vector<16x128xf32> to vector<16xf32>
    %21 = vector.shape_cast %20 : vector<16xf32> to vector<16x1xf32>
    %22 = arith.addf %16, %21 : vector<16x1xf32>
    %c0_12 = arith.constant 0 : index
    %c0_13 = arith.constant 0 : index
    %23 = vector.load %arg7[%c0_12, %c0_13] : memref<16x1xf32, #tpu.memory_space<vmem>>, vector<16x1xf32>
    tpu.vector_store %arg7[%c0_12, %c0_13], %22 {strides = array<i32>} : memref<16x1xf32, #tpu.memory_space<vmem>>, vector<16x1xf32>,
    %c0_14 = arith.constant 0 : index
    %c0_15 = arith.constant 0 : index
    %24 = vector.load %arg6[%c0_14, %c0_15] : memref<16x1xf32, #tpu.memory_space<vmem>>, vector<16x1xf32>
    tpu.vector_store %arg6[%c0_14, %c0_15], %12 {strides = array<i32>} : memref<16x1xf32, #tpu.memory_space<vmem>>, vector<16x1xf32>,
    %c1_i32 = arith.constant 1 : i32
    %25 = arith.cmpi eq, %arg1, %c1_i32 : i32
    %26 = arith.extui %25 : i1 to i32
    %c0_i32_16 = arith.constant 0 : i32
    %27 = arith.cmpi ne, %26, %c0_i32_16 : i32
    scf.if %27 {
      %c0_17 = arith.constant 0 : index
      %c0_18 = arith.constant 0 : index
      %28 = vector.load %arg6[%c0_17, %c0_18] : memref<16x1xf32, #tpu.memory_space<vmem>>, vector<16x1xf32>
      %c0_19 = arith.constant 0 : index
      %c0_20 = arith.constant 0 : index
      %29 = vector.load %arg7[%c0_19, %c0_20] : memref<16x1xf32, #tpu.memory_space<vmem>>, vector<16x1xf32>
      %30 = math.log %29 : vector<16x1xf32>
      %31 = arith.addf %28, %30 : vector<16x1xf32>
      %c0_21 = arith.constant 0 : index
      %c0_22 = arith.constant 0 : index
      %32 = vector.load %arg5[%c0_21, %c0_22] : memref<16x1xf32, #tpu.memory_space<vmem>>, vector<16x1xf32>
      tpu.vector_store %arg5[%c0_21, %c0_22], %31 {strides = array<i32>} : memref<16x1xf32, #tpu.memory_space<vmem>>, vector<16x1xf32>,
    } else {
    }
    return
  }
  func.func @transform_0(%arg0: i32, %arg1: i32) -> (i32, i32) {
    %c0_i32 = arith.constant 0 : i32
    %c0_i32_0 = arith.constant 0 : i32
    return %arg0, %c0_i32 : i32, i32
  }
  func.func @transform_1(%arg0: i32, %arg1: i32) -> (i32, i32) {
    %c0_i32 = arith.constant 0 : i32
    %c0_i32_0 = arith.constant 0 : i32
    return %arg1, %c0_i32 : i32, i32
  }
  func.func @transform_2(%arg0: i32, %arg1: i32) -> (i32, i32) {
    %c0_i32 = arith.constant 0 : i32
    %c0_i32_0 = arith.constant 0 : i32
    return %c0_i32, %arg1 : i32, i32
  }
  func.func @transform_3(%arg0: i32, %arg1: i32) -> (i32, i32) {
    %c0_i32 = arith.constant 0 : i32
    %c0_i32_0 = arith.constant 0 : i32
    return %arg0, %c0_i32 : i32, i32
  }
}

</mosaic_0001>

<llo_original>
// kernel: mlm_task_layer.3
$region0: #{mlm_task_layer.3}
  #allocation0 [shape = 'u32[]', space=smem, size = 0x4, offset = 0x4, fixed_abs, tag = 'smem constant byte address 0x4 - core index']
  #allocation1 [shape = 'u32[144,128]{1,0:T(1,128)}', space=vmem, size = 0x12000, scoped, tag = 'internal scratch']
  %s0 = inlined_call_operand.vmem [shape: bf16[32,32], index: 0, kind: input, shape index: {}]
  %s1 = inlined_call_operand.vmem [shape: bf16[256,32], index: 1, kind: input, shape index: {}]
  %s2 = inlined_call_operand.vmem [shape: f32[1,256], index: 2, kind: input, shape index: {}]
  %s3 = inlined_call_operand.vmem [shape: f32[32,1], index: 3, kind: input, shape index: {}]
  %s4 = inlined_call_operand.hbm [shape: f32[32,256], index: 4, kind: output, shape index: {}]
  %s5 = sld [smem:[#allocation0]]
  $region49: #{mlm_task_layer.3} parent=0
    _
  %s7 = ssub.s32 1, %s5
  %s8 = scalar_select 0, %s7, %s5
  $region1: #{mlm_task_layer.3} parent=0
    #allocation2 [shape = 'u8[16384]{0}', space=vmem, size = 0x4000, scoped, tag = 'output window, operand 0']
    #allocation3 [shape = 's32[2]{0}', space=sflag, size = 0x8, scoped, tag = 'scoped memory for mlm_task_layer.3']
    %9 = vsyncpa [#allocation3], 0
    %s10 = scalar_lea.sflag [#allocation3], 1
    %11 = vsyncpa %s10, 0
    loop: start=0, step=1, limit=6
    $region2: #{mlm_task_layer.3} parent=1 // loop_pre_header
      _
    $region3: #{mlm_task_layer.3} parent=1 // loop_header
      %s13 = sphi 0, %s17
      %p14 = scmp.ge.s32.totalorder %s13, 6
      %s20 = sphi 0, %s32
      %s21 = sphi 0, %s28
      %s22 = sphi 0, %s20
      %s23 = sphi 0, %s21
      %s24 = sphi 0, %s22
      %s25 = sphi 0, %s23
      %s35 = sphi 0, %s37
      %s38 = sphi 0, %s35
      %s39 = sphi 0, %s38
      %s55 = sphi 0, %s39
      %s61 = sphi 0, %s63
      %s64 = sphi 0, %s61
      %s65 = sphi 0, %s64
      %s81 = sphi 0, %s65
      %s87 = sphi 0, %s89
      %s90 = sphi 0, %s87
      %s91 = sphi 0, %s90
      %s107 = sphi 0, %s91
      %s113 = sphi 0, %s115
      %s116 = sphi 0, %s113
      %s117 = sphi 0, %s116
      %s133 = sphi 0, %s117
      %s141 = sphi 0, %s143
      %s144 = sphi 0, %s141
      %s145 = sphi 0, %s144
      %s161 = sphi 0, %s145
    $region4: #{mlm_task_layer.3} parent=1 // loop_header_branch
      %16 = sbr.rel (%p14) target = $region8
    $region5: #{mlm_task_layer.3} parent=1 // loop_body
      %s18 = ssub.s32 %s13, 1
      %s19 = ssub.s32 %s13, 2
      %s26 = sadd.s32 1, %s21
      %p27 = scmp.ge.s32.totalorder %s26, 2
      %s28 = scalar_select %p27, 0, %s26
      %s29 = sadd.s32 1, %s20
      %s30 = scalar_select %p27, %s29, %s20
      %p31 = scmp.ge.s32.totalorder %s30, 2
      %s32 = scalar_select %p31, 0, %s30
      %s33 = ssub.s32 %s21, %s28
      %p34 = scmp.eq.s32.totalorder %s33, 0
      %s36 = sadd.s32 %s35, 1
      %s37 = scalar_select %p34, %s35, %s36
      %p40 = pneg %p34
      %p41 = scmp.eq.s32.totalorder %s13, 3
      %p42 = por %p40, %p41
      %p43 = scmp.ne.s32.totalorder %s35, %s38
      %p44 = scmp.eq.s32.totalorder %s13, 0
      %p45 = por %p43, %p44
      %p46 = scmp.ne.s32.totalorder %s35, %s38
      %p47 = scmp.eq.s32.totalorder %s18, 3
      %p48 = por %p46, %p47
      %p49 = scmp.ne.s32.totalorder %s38, %s39
      %p50 = scmp.eq.s32.totalorder %s18, 0
      %p51 = por %p49, %p50
      %p52 = scmp.ne.s32.totalorder %s38, %s39
      %p53 = scmp.eq.s32.totalorder %s19, 3
      %p54 = por %p52, %p53
      %p56 = scmp.ne.s32.totalorder %s39, %s55
      %p57 = scmp.eq.s32.totalorder %s19, 0
      %p58 = por %p56, %p57
      %s59 = ssub.s32 %s20, %s32
      %p60 = scmp.eq.s32.totalorder %s59, 0
      %s62 = sadd.s32 %s61, 1
      %s63 = scalar_select %p60, %s61, %s62
      %p66 = pneg %p60
      %p67 = scmp.eq.s32.totalorder %s13, 3
      %p68 = por %p66, %p67
      %p69 = scmp.ne.s32.totalorder %s61, %s64
      %p70 = scmp.eq.s32.totalorder %s13, 0
      %p71 = por %p69, %p70
      %p72 = scmp.ne.s32.totalorder %s61, %s64
      %p73 = scmp.eq.s32.totalorder %s18, 3
      %p74 = por %p72, %p73
      %p75 = scmp.ne.s32.totalorder %s64, %s65
      %p76 = scmp.eq.s32.totalorder %s18, 0
      %p77 = por %p75, %p76
      %p78 = scmp.ne.s32.totalorder %s64, %s65
      %p79 = scmp.eq.s32.totalorder %s19, 3
      %p80 = por %p78, %p79
      %p82 = scmp.ne.s32.totalorder %s65, %s81
      %p83 = scmp.eq.s32.totalorder %s19, 0
      %p84 = por %p82, %p83
      %s85 = ssub.s32 %s20, %s32
      %p86 = scmp.eq.s32.totalorder %s85, 0
      %s88 = sadd.s32 %s87, 1
      %s89 = scalar_select %p86, %s87, %s88
      %p92 = pneg %p86
      %p93 = scmp.eq.s32.totalorder %s13, 3
      %p94 = por %p92, %p93
      %p95 = scmp.ne.s32.totalorder %s87, %s90
      %p96 = scmp.eq.s32.totalorder %s13, 0
      %p97 = por %p95, %p96
      %p98 = scmp.ne.s32.totalorder %s87, %s90
      %p99 = scmp.eq.s32.totalorder %s18, 3
      %p100 = por %p98, %p99
      %p101 = scmp.ne.s32.totalorder %s90, %s91
      %p102 = scmp.eq.s32.totalorder %s18, 0
      %p103 = por %p101, %p102
      %p104 = scmp.ne.s32.totalorder %s90, %s91
      %p105 = scmp.eq.s32.totalorder %s19, 3
      %p106 = por %p104, %p105
      %p108 = scmp.ne.s32.totalorder %s91, %s107
      %p109 = scmp.eq.s32.totalorder %s19, 0
      %p110 = por %p108, %p109
      %s111 = ssub.s32 %s21, %s28
      %p112 = scmp.eq.s32.totalorder %s111, 0
      %s114 = sadd.s32 %s113, 1
      %s115 = scalar_select %p112, %s113, %s114
      %p118 = pneg %p112
      %p119 = scmp.eq.s32.totalorder %s13, 3
      %p120 = por %p118, %p119
      %p121 = scmp.ne.s32.totalorder %s113, %s116
      %p122 = scmp.eq.s32.totalorder %s13, 0
      %p123 = por %p121, %p122
      %p124 = scmp.ne.s32.totalorder %s113, %s116
      %p125 = scmp.eq.s32.totalorder %s18, 3
      %p126 = por %p124, %p125
      %p127 = scmp.ne.s32.totalorder %s116, %s117
      %p128 = scmp.eq.s32.totalorder %s18, 0
      %p129 = por %p127, %p128
      %p130 = scmp.ne.s32.totalorder %s116, %s117
      %p131 = scmp.eq.s32.totalorder %s19, 3
      %p132 = por %p130, %p131
      %p134 = scmp.ne.s32.totalorder %s117, %s133
      %p135 = scmp.eq.s32.totalorder %s19, 0
      %p136 = por %p134, %p135
      %s137 = ssub.s32 %s21, %s28
      %s138 = ssub.s32 %s20, %s32
      %s139 = sor.u32 %s137, %s138
      %p140 = scmp.eq.s32.totalorder %s139, 0
      %s142 = sadd.s32 %s141, 1
      %s143 = scalar_select %p140, %s141, %s142
      %p146 = pneg %p140
      %p147 = scmp.eq.s32.totalorder %s13, 3
      %p148 = por %p146, %p147
      %p149 = scmp.ne.s32.totalorder %s141, %s144
      %p150 = scmp.eq.s32.totalorder %s13, 0
      %p151 = por %p149, %p150
      %p152 = scmp.ne.s32.totalorder %s141, %s144
      %p153 = scmp.eq.s32.totalorder %s18, 3
      %p154 = por %p152, %p153
      %p155 = scmp.ne.s32.totalorder %s144, %s145
      %p156 = scmp.eq.s32.totalorder %s18, 0
      %p157 = por %p155, %p156
      %p158 = scmp.ne.s32.totalorder %s144, %s145
      %p159 = scmp.eq.s32.totalorder %s19, 3
      %p160 = por %p158, %p159
      %p162 = scmp.ne.s32.totalorder %s145, %s161
      %p163 = scmp.eq.s32.totalorder %s19, 0
      %p164 = por %p162, %p163
      %p165 = scmp.le.s32.totalorder 1, %s13
      %p166 = scmp.lt.s32.totalorder %s13, 5
      %p167 = pnand %p165, %p166
      %p168 = pneg %p167
      // Predicated region
      $region9: #{mlm_task_layer.3} parent=5 // pred_check
        _
      $region10: #{mlm_task_layer.3} parent=5 // pred_check_branch
        %170 = sbr.rel (%p167) target = $region12
      $region11: #{mlm_task_layer.3} parent=5 // pred_region
        %s171 = ssub.s32 %s13, 1
      $region12: #{mlm_task_layer.3} parent=5 // pred_fallthru
        _
      %p172 = scmp.lt.s32.totalorder %s13, 4
      // Predicated region
      $region13: #{mlm_task_layer.3} parent=5 // pred_check
        %p173 = pneg %p172
      $region14: #{mlm_task_layer.3} parent=5 // pred_check_branch
        %175 = sbr.rel (%p173) target = $region16
      $region15: #{mlm_task_layer.3} parent=5 // pred_region
        // Predicated region
        $region17: #{mlm_task_layer.3} parent=15 // pred_check
          %p176 = pneg %p45
        $region18: #{mlm_task_layer.3} parent=15 // pred_check_branch
          %178 = sbr.rel (%p176) target = $region20
        $region19: #{mlm_task_layer.3} parent=15 // pred_region
          %s179 = smul.u32 2, %s21
          %p180 = scmp.lt.s32.totalorder %s179, 3
          %s181 = scalar_select %p180, %s179, 3
          %s182 = smul.addr %s181, 4
          %s183 = scalar_lea.vmem %s0, %s182
          %s184 = smul.u32 2, %s21
        $region20: #{mlm_task_layer.3} parent=15 // pred_fallthru
          _
        // Predicated region
        $region21: #{mlm_task_layer.3} parent=15 // pred_check
          %p185 = pneg %p71
        $region22: #{mlm_task_layer.3} parent=15 // pred_check_branch
          %187 = sbr.rel (%p185) target = $region24
        $region23: #{mlm_task_layer.3} parent=15 // pred_region
          %s188 = smul.u32 16, %s20
          %p189 = scmp.lt.s32.totalorder %s188, 31
          %s190 = scalar_select %p189, %s188, 31
          %s191 = smul.addr %s190, 4
          %s192 = scalar_lea.vmem %s1, %s191
          %s193 = smul.u32 16, %s20
        $region24: #{mlm_task_layer.3} parent=15 // pred_fallthru
          _
        // Predicated region
        $region25: #{mlm_task_layer.3} parent=15 // pred_check
          %p194 = pneg %p97
        $region26: #{mlm_task_layer.3} parent=15 // pred_check_branch
          %196 = sbr.rel (%p194) target = $region28
        $region27: #{mlm_task_layer.3} parent=15 // pred_region
          %p197 = scmp.lt.s32.totalorder %s20, 1
          %s198 = scalar_select %p197, %s20, 1
          %s199 = scalar_lea.vmem %s2, %s198
        $region28: #{mlm_task_layer.3} parent=15 // pred_fallthru
          _
        // Predicated region
        $region29: #{mlm_task_layer.3} parent=15 // pred_check
          %p200 = pneg %p123
        $region30: #{mlm_task_layer.3} parent=15 // pred_check_branch
          %202 = sbr.rel (%p200) target = $region32
        $region31: #{mlm_task_layer.3} parent=15 // pred_region
          %s203 = smul.u32 2, %s21
          %p204 = scmp.lt.s32.totalorder %s203, 3
          %s205 = scalar_select %p204, %s203, 3
          %s206 = smul.addr %s205, 8
          %s207 = scalar_lea.vmem %s3, %s206
          %s208 = smul.u32 2, %s21
        $region32: #{mlm_task_layer.3} parent=15 // pred_fallthru
          _
      $region16: #{mlm_task_layer.3} parent=5 // pred_fallthru
        _
      %p209 = scmp.le.s32.totalorder 1, %s13
      %p210 = scmp.lt.s32.totalorder %s13, 5
      %p211 = pnand %p209, %p210
      %p212 = pneg %p211
      // Predicated region
      $region33: #{mlm_task_layer.3} parent=5 // pred_check
        _
      $region34: #{mlm_task_layer.3} parent=5 // pred_check_branch
        %214 = sbr.rel (%p211) target = $region36
      $region35: #{mlm_task_layer.3} parent=5 // pred_region
        %s215 = ssub.s32 %s13, 1
        %s216 = smul.u32 2, %s23
        %p217 = scmp.lt.s32.totalorder %s216, 3
        %s218 = scalar_select %p217, %s216, 3
        %s219 = smul.addr %s218, 4
        %s220 = scalar_lea.vmem %s0, %s219
        %p221 = pneg %p51
        %p222 = pneg %p48
        %s223 = smul.u32 16, %s22
        %p224 = scmp.lt.s32.totalorder %s223, 31
        %s225 = scalar_select %p224, %s223, 31
        %s226 = smul.addr %s225, 4
        %s227 = scalar_lea.vmem %s1, %s226
        %p228 = pneg %p77
        %p229 = pneg %p74
        %p230 = scmp.lt.s32.totalorder %s22, 1
        %s231 = scalar_select %p230, %s22, 1
        %s232 = scalar_lea.vmem %s2, %s231
        %p233 = pneg %p103
        %p234 = pneg %p100
        %s235 = smul.u32 2, %s23
        %p236 = scmp.lt.s32.totalorder %s235, 3
        %s237 = scalar_select %p236, %s235, 3
        %s238 = smul.addr %s237, 8
        %s239 = scalar_lea.vmem %s3, %s238
        %p240 = pneg %p129
        %p241 = pneg %p126
        %p242 = pneg %p157
        %p243 = pneg %p154
        %s244 = sand.u32 %s144, 1
        %s245 = scalar_lea.sflag [#allocation3], %s244
        %s246 = sand.u32 %s144, 1
        %s247 = smul.addr %s246, 16
        %s248 = scalar_lea.vmem [#allocation2], %s247
        %s249 = smul.u32 2, %s23
        %p250 = scmp.lt.s32.totalorder %s249, 3
        %s251 = scalar_select %p250, %s249, 3
        %s252 = smul.addr %s251, 4
        %s253 = scalar_lea.vmem %s0, %s252
        %s254 = smul.u32 2, %s23
        %s255 = smul.u32 16, %s22
        %p256 = scmp.lt.s32.totalorder %s255, 31
        %s257 = scalar_select %p256, %s255, 31
        %s258 = smul.addr %s257, 4
        %s259 = scalar_lea.vmem %s1, %s258
        %s260 = smul.u32 16, %s22
        %p261 = scmp.lt.s32.totalorder %s22, 1
        %s262 = scalar_select %p261, %s22, 1
        %s263 = scalar_lea.vmem %s2, %s262
        %s264 = smul.u32 2, %s23
        %p265 = scmp.lt.s32.totalorder %s264, 3
        %s266 = scalar_select %p265, %s264, 3
        %s267 = smul.addr %s266, 8
        %s268 = scalar_lea.vmem %s3, %s267
        %s269 = smul.u32 2, %s23
        %s270 = smul.u32 2, %s23
        %v272 = vld [vmem:[%s253] sm:$0xf]
        %v273 = vld [vmem:[%s253 + $0x4] sm:$0xf]
        %v274 = vld [vmem:[%s259] sm:$0xf]
        %v275 = vld [vmem:[%s259 + $0x4] sm:$0xf]
        %v276 = vld [vmem:[%s259 + $0x8] sm:$0xf]
        %v277 = vld [vmem:[%s259 + $0xc] sm:$0xf]
        %v278 = vld [vmem:[%s259 + $0x10] sm:$0xf]
        %v279 = vld [vmem:[%s259 + $0x14] sm:$0xf]
        %v280 = vld [vmem:[%s259 + $0x18] sm:$0xf]
        %v281 = vld [vmem:[%s259 + $0x1c] sm:$0xf]
        %v282 = vld [vmem:[%s259 + $0x20] sm:$0xf]
        %v283 = vld [vmem:[%s259 + $0x24] sm:$0xf]
        %v284 = vld [vmem:[%s259 + $0x28] sm:$0xf]
        %v285 = vld [vmem:[%s259 + $0x2c] sm:$0xf]
        %v286 = vld [vmem:[%s259 + $0x30] sm:$0xf]
        %v287 = vld [vmem:[%s259 + $0x34] sm:$0xf]
        %v288 = vld [vmem:[%s259 + $0x38] sm:$0xf]
        %v289 = vld [vmem:[%s259 + $0x3c] sm:$0xf]
        %v290 = vld [vmem:[%s263] sm:$0x1]
        %v292 = vlaneseq
        %v293 = vshrl.u32 %v292, 7
        %v294 = vsub.s32 0, %v293
        %v295 = vrot.slane %v290, %v294
        %v299 = vunpack.c.l.b16 %v272
        %v300 = vunpack.c.l.b16 %v273
        %v301 = vpack.c.b16 %v300, %v299
        %v318 = vunpack.c.l.b16 %v274
        %v319 = vunpack.c.l.b16 %v275
        %v320 = vunpack.c.l.b16 %v276
        %v321 = vunpack.c.l.b16 %v277
        %v322 = vunpack.c.l.b16 %v278
        %v323 = vunpack.c.l.b16 %v279
        %v324 = vunpack.c.l.b16 %v280
        %v325 = vunpack.c.l.b16 %v281
        %v326 = vunpack.c.l.b16 %v282
        %v327 = vunpack.c.l.b16 %v283
        %v328 = vunpack.c.l.b16 %v284
        %v329 = vunpack.c.l.b16 %v285
        %v330 = vunpack.c.l.b16 %v286
        %v331 = vunpack.c.l.b16 %v287
        %v332 = vunpack.c.l.b16 %v288
        %v333 = vunpack.c.l.b16 %v289
        %v334 = vpack.c.b16 %v319, %v318
        %v335 = vpack.c.b16 %v321, %v320
        %v336 = vpack.c.b16 %v323, %v322
        %v337 = vpack.c.b16 %v325, %v324
        %v338 = vpack.c.b16 %v327, %v326
        %v339 = vpack.c.b16 %v329, %v328
        %v340 = vpack.c.b16 %v331, %v330
        %v341 = vpack.c.b16 %v333, %v332
        %vm342 = vcmask 261120
        %v344 = vsel %vm342, %v301, 0
        %v347 = vsel %vm342, %v334, 0
        %v350 = vsel %vm342, %v335, 0
        %v353 = vsel %vm342, %v336, 0
        %v356 = vsel %vm342, %v337, 0
        %v359 = vsel %vm342, %v338, 0
        %v362 = vsel %vm342, %v339, 0
        %v365 = vsel %vm342, %v340, 0
        %v368 = vsel %vm342, %v341, 0
        %370 = vmatprep.subr.bf16.mxu0 0
        %371 = vmatpush1.bf16.xpose.msra.mxu0 %v347
        %372 = vmatprep.subr.bf16.mxu0 0
        %373 = vmatpush1.bf16.xpose.msra.mxu0 %v350
        %374 = vmatprep.subr.bf16.mxu0 0
        %375 = vmatpush1.bf16.xpose.msra.mxu0 %v353
        %376 = vmatprep.subr.bf16.mxu0 0
        %377 = vmatpush1.bf16.xpose.msra.mxu0 %v356
        %378 = vmatprep.subr.bf16.mxu0 0
        %379 = vmatpush1.bf16.xpose.msra.mxu0 %v359
        %380 = vmatprep.subr.bf16.mxu0 0
        %381 = vmatpush1.bf16.xpose.msra.mxu0 %v362
        %382 = vmatprep.subr.bf16.mxu0 0
        %383 = vmatpush1.bf16.xpose.msra.mxu0 %v365
        %384 = vmatprep.subr.bf16.mxu0 0
        %385 = vmatpush1.bf16.xpose.msra.mxu0 %v368
        %386 = vmatprep.subr.bf16.mxu0 0
        %387 = vmatpush1.bf16.xpose.msra.mxu0 0
        %388 = vmatprep.subr.bf16.mxu0 0
        %389 = vmatpush1.bf16.xpose.msra.mxu0 0
        %390 = vmatprep.subr.bf16.mxu0 0
        %391 = vmatpush1.bf16.xpose.msra.mxu0 0
        %392 = vmatprep.subr.bf16.mxu0 0
        %393 = vmatpush1.bf16.xpose.msra.mxu0 0
        %394 = vmatprep.subr.bf16.mxu0 0
        %395 = vmatpush1.bf16.xpose.msra.mxu0 0
        %396 = vmatprep.subr.bf16.mxu0 0
        %397 = vmatpush1.bf16.xpose.msra.mxu0 0
        %398 = vmatprep.subr.bf16.mxu0 0
        %399 = vmatpush1.bf16.xpose.msra.mxu0 0
        %400 = vmatprep.subr.bf16.mxu0 0
        %401 = vmatpush1.bf16.xpose.msra.mxu0 0
        %402 = vmatprep.mubr.bf16.mxu0 0
        %403 = vmatmul.mubr.bf16.gmra.mrb[0].mxu0 %v344
        %v404 = vpop.f32.mrb[0].mxu0
        %v405 = vadd.f32 %v295, %v404
        %v406 = vpop.f32.mrb[0].mxu0
        %v407 = vpop.f32.mrb[0].mxu0
        %v408 = vadd.f32 %v295, %v407
        %v409 = vpop.f32.mrb[0].mxu0
        %410 = vdwg.mxu0
        %v411 = vld [vmem:[%s268] sm:$0xff]
        %v412 = vld [vmem:[%s268 + $0x8] sm:$0xff]
        %414 = vset.pattern.permute.xlu0 0
        %415 = vperm.xlu0 %414, %v411
        %v416 = vpop.permute.xlu0 %415
        %419 = vset.pattern.permute.xlu0 0
        %420 = vperm.xlu0 %419, %v412
        %v421 = vpop.permute.xlu0 %420
        %v423 = vsub.f32 %v405, %v416
        %v424 = vsub.f32 %v408, %v421
        %v425 = vmul.f32 %v423, 1.442695
        %v426 = vpow.pop %v425
        %v427 = vmul.f32 %v424, 1.442695
        %v428 = vpow.pop %v427
        %429 = vst [vmem:[%s248] sm:$0xff] %v426
        %430 = vst [vmem:[%s248 + $0x8] sm:$0xff] %v428
        %s431 = sand.u32 %s144, 1
        %s432 = scalar_lea.sflag [#allocation3], %s431
        %s433 = sand.u32 %s144, 1
        %s434 = smul.addr %s433, 16
        %s435 = scalar_lea.vmem [#allocation2], %s434
        // Predicated region
        $region37: #{mlm_task_layer.3} parent=35 // pred_check
          %p436 = pneg %p154
        $region38: #{mlm_task_layer.3} parent=35 // pred_check_branch
          %438 = sbr.rel (%p436) target = $region40
        $region39: #{mlm_task_layer.3} parent=35 // pred_region
          %s439 = smul.u32 2, %s23
          %s441 = ssub.s32 256, 256
          %442 = vsyncadd %s432, %s441
          %s443 = smul.addr %s439, 2
          %s444 = sadd.s32 %s22, %s443
          %s445 = smul.addr %s444, 128
          %s446 = scalar_lea.hbm %s4, %s445
          %s447 = sshll.u32 %s435, 4
          %s448 = int_to_ptr.vmem [resolvable:$true] %s447
          %453 = dma.vmem_to_hbm [thread:$0]  %s448, 256, %s446, %s432, 128, 256, 8
        $region40: #{mlm_task_layer.3} parent=35 // pred_fallthru
          _
      $region36: #{mlm_task_layer.3} parent=5 // pred_fallthru
        _
      %p454 = scmp.le.s32.totalorder 2, %s13
      // Predicated region
      $region41: #{mlm_task_layer.3} parent=5 // pred_check
        %p455 = pneg %p454
      $region42: #{mlm_task_layer.3} parent=5 // pred_check_branch
        %457 = sbr.rel (%p455) target = $region44
      $region43: #{mlm_task_layer.3} parent=5 // pred_region
        %s458 = ssub.s32 %s13, 2
        // Predicated region
        $region45: #{mlm_task_layer.3} parent=43 // pred_check
          %p459 = pneg %p160
        $region46: #{mlm_task_layer.3} parent=43 // pred_check_branch
          %461 = sbr.rel (%p459) target = $region48
        $region47: #{mlm_task_layer.3} parent=43 // pred_region
          %s462 = sand.u32 %s145, 1
          %s463 = scalar_lea.sflag [#allocation3], %s462
          %s464 = sand.u32 %s145, 1
          %s465 = smul.addr %s464, 16
          %s466 = scalar_lea.vmem [#allocation2], %s465
          %467 = dma.done %s463, 256
        $region48: #{mlm_task_layer.3} parent=43 // pred_fallthru
          _
      $region44: #{mlm_task_layer.3} parent=5 // pred_fallthru
        _
    $region6: #{mlm_task_layer.3} parent=1 // loop_footer
      %s17 = sadd.s32 1, %s13
    $region7: #{mlm_task_layer.3} parent=1 // loop_footer_branch
      %12 = sbr.rel target = $region3
    $region8: #{mlm_task_layer.3} parent=1 // loop_exit
      _
    %468 = vsyncpa [#allocation3], 1
    %s469 = scalar_lea.sflag [#allocation3], 1
    %470 = vsyncpa %s469, 1

// kernel: mlm_task_layer.2
$region0: #{mlm_task_layer.2}
  #allocation0 [shape = 'u32[]', space=smem, size = 0x4, offset = 0x4, fixed_abs, tag = 'smem constant byte address 0x4 - core index']
  #allocation1 [shape = 'u32[144,128]{1,0:T(1,128)}', space=vmem, size = 0x12000, scoped, tag = 'internal scratch']
  #allocation2 [shape = 'f32[16,1]{1,0:T(8,128)}', space=vmem, size = 0x2000, scoped, tag = 'scratch operand']
  #allocation3 [shape = 'f32[16,1]{1,0:T(8,128)}', space=vmem, size = 0x2000, scoped, tag = 'scratch operand']
  %s0 = inlined_call_operand.vmem [shape: bf16[32,32], index: 0, kind: input, shape index: {}]
  %s1 = inlined_call_operand.vmem [shape: bf16[256,32], index: 1, kind: input, shape index: {}]
  %s2 = inlined_call_operand.vmem [shape: f32[1,256], index: 2, kind: input, shape index: {}]
  %s3 = inlined_call_operand.vmem [shape: f32[32,1], index: 3, kind: output, shape index: {}]
  %s4 = sld [smem:[#allocation0]]
  $region53: #{mlm_task_layer.2} parent=0
    _
  %s6 = ssub.s32 1, %s4
  %s7 = scalar_select 0, %s6, %s4
  loop: start=0, step=1, limit=6
  $region2: #{mlm_task_layer.2} parent=0 // loop_pre_header
    _
  $region3: #{mlm_task_layer.2} parent=0 // loop_header
    %s9 = sphi 0, %s13
    %p10 = scmp.ge.s32.totalorder %s9, 6
    %s16 = sphi 0, %s28
    %s17 = sphi 0, %s24
    %s18 = sphi 0, %s16
    %s19 = sphi 0, %s17
    %s20 = sphi 0, %s18
    %s21 = sphi 0, %s19
    %s31 = sphi 0, %s33
    %s34 = sphi 0, %s31
    %s35 = sphi 0, %s34
    %s51 = sphi 0, %s35
    %s57 = sphi 0, %s59
    %s60 = sphi 0, %s57
    %s61 = sphi 0, %s60
    %s77 = sphi 0, %s61
    %s83 = sphi 0, %s85
    %s86 = sphi 0, %s83
    %s87 = sphi 0, %s86
    %s103 = sphi 0, %s87
    %s109 = sphi 0, %s111
    %s112 = sphi 0, %s109
    %s113 = sphi 0, %s112
    %s129 = sphi 0, %s113
  $region4: #{mlm_task_layer.2} parent=0 // loop_header_branch
    %12 = sbr.rel (%p10) target = $region8
  $region5: #{mlm_task_layer.2} parent=0 // loop_body
    %s14 = ssub.s32 %s9, 1
    %s15 = ssub.s32 %s9, 2
    %s22 = sadd.s32 1, %s17
    %p23 = scmp.ge.s32.totalorder %s22, 2
    %s24 = scalar_select %p23, 0, %s22
    %s25 = sadd.s32 1, %s16
    %s26 = scalar_select %p23, %s25, %s16
    %p27 = scmp.ge.s32.totalorder %s26, 2
    %s28 = scalar_select %p27, 0, %s26
    %s29 = ssub.s32 %s16, %s28
    %p30 = scmp.eq.s32.totalorder %s29, 0
    %s32 = sadd.s32 %s31, 1
    %s33 = scalar_select %p30, %s31, %s32
    %p36 = pneg %p30
    %p37 = scmp.eq.s32.totalorder %s9, 3
    %p38 = por %p36, %p37
    %p39 = scmp.ne.s32.totalorder %s31, %s34
    %p40 = scmp.eq.s32.totalorder %s9, 0
    %p41 = por %p39, %p40
    %p42 = scmp.ne.s32.totalorder %s31, %s34
    %p43 = scmp.eq.s32.totalorder %s14, 3
    %p44 = por %p42, %p43
    %p45 = scmp.ne.s32.totalorder %s34, %s35
    %p46 = scmp.eq.s32.totalorder %s14, 0
    %p47 = por %p45, %p46
    %p48 = scmp.ne.s32.totalorder %s34, %s35
    %p49 = scmp.eq.s32.totalorder %s15, 3
    %p50 = por %p48, %p49
    %p52 = scmp.ne.s32.totalorder %s35, %s51
    %p53 = scmp.eq.s32.totalorder %s15, 0
    %p54 = por %p52, %p53
    %s55 = ssub.s32 %s17, %s24
    %p56 = scmp.eq.s32.totalorder %s55, 0
    %s58 = sadd.s32 %s57, 1
    %s59 = scalar_select %p56, %s57, %s58
    %p62 = pneg %p56
    %p63 = scmp.eq.s32.totalorder %s9, 3
    %p64 = por %p62, %p63
    %p65 = scmp.ne.s32.totalorder %s57, %s60
    %p66 = scmp.eq.s32.totalorder %s9, 0
    %p67 = por %p65, %p66
    %p68 = scmp.ne.s32.totalorder %s57, %s60
    %p69 = scmp.eq.s32.totalorder %s14, 3
    %p70 = por %p68, %p69
    %p71 = scmp.ne.s32.totalorder %s60, %s61
    %p72 = scmp.eq.s32.totalorder %s14, 0
    %p73 = por %p71, %p72
    %p74 = scmp.ne.s32.totalorder %s60, %s61
    %p75 = scmp.eq.s32.totalorder %s15, 3
    %p76 = por %p74, %p75
    %p78 = scmp.ne.s32.totalorder %s61, %s77
    %p79 = scmp.eq.s32.totalorder %s15, 0
    %p80 = por %p78, %p79
    %s81 = ssub.s32 %s17, %s24
    %p82 = scmp.eq.s32.totalorder %s81, 0
    %s84 = sadd.s32 %s83, 1
    %s85 = scalar_select %p82, %s83, %s84
    %p88 = pneg %p82
    %p89 = scmp.eq.s32.totalorder %s9, 3
    %p90 = por %p88, %p89
    %p91 = scmp.ne.s32.totalorder %s83, %s86
    %p92 = scmp.eq.s32.totalorder %s9, 0
    %p93 = por %p91, %p92
    %p94 = scmp.ne.s32.totalorder %s83, %s86
    %p95 = scmp.eq.s32.totalorder %s14, 3
    %p96 = por %p94, %p95
    %p97 = scmp.ne.s32.totalorder %s86, %s87
    %p98 = scmp.eq.s32.totalorder %s14, 0
    %p99 = por %p97, %p98
    %p100 = scmp.ne.s32.totalorder %s86, %s87
    %p101 = scmp.eq.s32.totalorder %s15, 3
    %p102 = por %p100, %p101
    %p104 = scmp.ne.s32.totalorder %s87, %s103
    %p105 = scmp.eq.s32.totalorder %s15, 0
    %p106 = por %p104, %p105
    %s107 = ssub.s32 %s16, %s28
    %p108 = scmp.eq.s32.totalorder %s107, 0
    %s110 = sadd.s32 %s109, 1
    %s111 = scalar_select %p108, %s109, %s110
    %p114 = pneg %p108
    %p115 = scmp.eq.s32.totalorder %s9, 3
    %p116 = por %p114, %p115
    %p117 = scmp.ne.s32.totalorder %s109, %s112
    %p118 = scmp.eq.s32.totalorder %s9, 0
    %p119 = por %p117, %p118
    %p120 = scmp.ne.s32.totalorder %s109, %s112
    %p121 = scmp.eq.s32.totalorder %s14, 3
    %p122 = por %p120, %p121
    %p123 = scmp.ne.s32.totalorder %s112, %s113
    %p124 = scmp.eq.s32.totalorder %s14, 0
    %p125 = por %p123, %p124
    %p126 = scmp.ne.s32.totalorder %s112, %s113
    %p127 = scmp.eq.s32.totalorder %s15, 3
    %p128 = por %p126, %p127
    %p130 = scmp.ne.s32.totalorder %s113, %s129
    %p131 = scmp.eq.s32.totalorder %s15, 0
    %p132 = por %p130, %p131
    %p133 = scmp.le.s32.totalorder 1, %s9
    %p134 = scmp.lt.s32.totalorder %s9, 5
    %p135 = pnand %p133, %p134
    %p136 = pneg %p135
    // Predicated region
    $region9: #{mlm_task_layer.2} parent=5 // pred_check
      _
    $region10: #{mlm_task_layer.2} parent=5 // pred_check_branch
      %138 = sbr.rel (%p135) target = $region12
    $region11: #{mlm_task_layer.2} parent=5 // pred_region
      %s139 = ssub.s32 %s9, 1
    $region12: #{mlm_task_layer.2} parent=5 // pred_fallthru
      _
    %p140 = scmp.lt.s32.totalorder %s9, 4
    // Predicated region
    $region13: #{mlm_task_layer.2} parent=5 // pred_check
      %p141 = pneg %p140
    $region14: #{mlm_task_layer.2} parent=5 // pred_check_branch
      %143 = sbr.rel (%p141) target = $region16
    $region15: #{mlm_task_layer.2} parent=5 // pred_region
      // Predicated region
      $region17: #{mlm_task_layer.2} parent=15 // pred_check
        %p144 = pneg %p41
      $region18: #{mlm_task_layer.2} parent=15 // pred_check_branch
        %146 = sbr.rel (%p144) target = $region20
      $region19: #{mlm_task_layer.2} parent=15 // pred_region
        %s147 = smul.u32 2, %s16
        %p148 = scmp.lt.s32.totalorder %s147, 3
        %s149 = scalar_select %p148, %s147, 3
        %s150 = smul.addr %s149, 4
        %s151 = scalar_lea.vmem %s0, %s150
        %s152 = smul.u32 2, %s16
      $region20: #{mlm_task_layer.2} parent=15 // pred_fallthru
        _
      // Predicated region
      $region21: #{mlm_task_layer.2} parent=15 // pred_check
        %p153 = pneg %p67
      $region22: #{mlm_task_layer.2} parent=15 // pred_check_branch
        %155 = sbr.rel (%p153) target = $region24
      $region23: #{mlm_task_layer.2} parent=15 // pred_region
        %s156 = smul.u32 16, %s17
        %p157 = scmp.lt.s32.totalorder %s156, 31
        %s158 = scalar_select %p157, %s156, 31
        %s159 = smul.addr %s158, 4
        %s160 = scalar_lea.vmem %s1, %s159
        %s161 = smul.u32 16, %s17
      $region24: #{mlm_task_layer.2} parent=15 // pred_fallthru
        _
      // Predicated region
      $region25: #{mlm_task_layer.2} parent=15 // pred_check
        %p162 = pneg %p93
      $region26: #{mlm_task_layer.2} parent=15 // pred_check_branch
        %164 = sbr.rel (%p162) target = $region28
      $region27: #{mlm_task_layer.2} parent=15 // pred_region
        %p165 = scmp.lt.s32.totalorder %s17, 1
        %s166 = scalar_select %p165, %s17, 1
        %s167 = scalar_lea.vmem %s2, %s166
      $region28: #{mlm_task_layer.2} parent=15 // pred_fallthru
        _
    $region16: #{mlm_task_layer.2} parent=5 // pred_fallthru
      _
    %p168 = scmp.le.s32.totalorder 1, %s9
    %p169 = scmp.lt.s32.totalorder %s9, 5
    %p170 = pnand %p168, %p169
    %p171 = pneg %p170
    // Predicated region
    $region29: #{mlm_task_layer.2} parent=5 // pred_check
      _
    $region30: #{mlm_task_layer.2} parent=5 // pred_check_branch
      %173 = sbr.rel (%p170) target = $region32
    $region31: #{mlm_task_layer.2} parent=5 // pred_region
      %s174 = ssub.s32 %s9, 1
      %s175 = smul.u32 2, %s18
      %p176 = scmp.lt.s32.totalorder %s175, 3
      %s177 = scalar_select %p176, %s175, 3
      %s178 = smul.addr %s177, 4
      %s179 = scalar_lea.vmem %s0, %s178
      %p180 = pneg %p47
      %p181 = pneg %p44
      %s182 = smul.u32 16, %s19
      %p183 = scmp.lt.s32.totalorder %s182, 31
      %s184 = scalar_select %p183, %s182, 31
      %s185 = smul.addr %s184, 4
      %s186 = scalar_lea.vmem %s1, %s185
      %p187 = pneg %p73
      %p188 = pneg %p70
      %p189 = scmp.lt.s32.totalorder %s19, 1
      %s190 = scalar_select %p189, %s19, 1
      %s191 = scalar_lea.vmem %s2, %s190
      %p192 = pneg %p99
      %p193 = pneg %p96
      %p194 = pneg %p125
      %p195 = pneg %p122
      %s196 = smul.u32 2, %s18
      %p197 = scmp.lt.s32.totalorder %s196, 3
      %s198 = scalar_select %p197, %s196, 3
      %s199 = smul.addr %s198, 8
      %s200 = scalar_lea.vmem %s3, %s199
      %s201 = smul.u32 2, %s18
      %p202 = scmp.lt.s32.totalorder %s201, 3
      %s203 = scalar_select %p202, %s201, 3
      %s204 = smul.addr %s203, 4
      %s205 = scalar_lea.vmem %s0, %s204
      %s206 = smul.u32 2, %s18
      %s207 = smul.u32 16, %s19
      %p208 = scmp.lt.s32.totalorder %s207, 31
      %s209 = scalar_select %p208, %s207, 31
      %s210 = smul.addr %s209, 4
      %s211 = scalar_lea.vmem %s1, %s210
      %s212 = smul.u32 16, %s19
      %p213 = scmp.lt.s32.totalorder %s19, 1
      %s214 = scalar_select %p213, %s19, 1
      %s215 = scalar_lea.vmem %s2, %s214
      %s216 = smul.u32 2, %s18
      %p217 = scmp.lt.s32.totalorder %s216, 3
      %s218 = scalar_select %p217, %s216, 3
      %s219 = smul.addr %s218, 8
      %s220 = scalar_lea.vmem %s3, %s219
      %s221 = smul.u32 2, %s18
      %p223 = scmp.eq.s32.totalorder %s19, 0
      // Predicated region
      $region33: #{mlm_task_layer.2} parent=31 // pred_check
        %p224 = pneg %p223
      $region34: #{mlm_task_layer.2} parent=31 // pred_check_branch
        %226 = sbr.rel (%p224) target = $region36
      $region35: #{mlm_task_layer.2} parent=31 // pred_region
        %vm227 = vcmask 7168
        %228 = vst.msk [vmem:[#allocation2] sm:$0xff] %vm227, -1e+30
        %229 = vst.msk [vmem:[#allocation2 + $0x8] sm:$0xff] %vm227, -1e+30
        %230 = vst.msk [vmem:[#allocation3] sm:$0xff] %vm227, 0.0
        %231 = vst.msk [vmem:[#allocation3 + $0x8] sm:$0xff] %vm227, 0.0
      $region36: #{mlm_task_layer.2} parent=31 // pred_fallthru
        _
      %v232 = vld [vmem:[%s205] sm:$0xf]
      %v233 = vld [vmem:[%s205 + $0x4] sm:$0xf]
      %v234 = vld [vmem:[%s211] sm:$0xf]
      %v235 = vld [vmem:[%s211 + $0x4] sm:$0xf]
      %v236 = vld [vmem:[%s211 + $0x8] sm:$0xf]
      %v237 = vld [vmem:[%s211 + $0xc] sm:$0xf]
      %v238 = vld [vmem:[%s211 + $0x10] sm:$0xf]
      %v239 = vld [vmem:[%s211 + $0x14] sm:$0xf]
      %v240 = vld [vmem:[%s211 + $0x18] sm:$0xf]
      %v241 = vld [vmem:[%s211 + $0x1c] sm:$0xf]
      %v242 = vld [vmem:[%s211 + $0x20] sm:$0xf]
      %v243 = vld [vmem:[%s211 + $0x24] sm:$0xf]
      %v244 = vld [vmem:[%s211 + $0x28] sm:$0xf]
      %v245 = vld [vmem:[%s211 + $0x2c] sm:$0xf]
      %v246 = vld [vmem:[%s211 + $0x30] sm:$0xf]
      %v247 = vld [vmem:[%s211 + $0x34] sm:$0xf]
      %v248 = vld [vmem:[%s211 + $0x38] sm:$0xf]
      %v249 = vld [vmem:[%s211 + $0x3c] sm:$0xf]
      %v250 = vld [vmem:[%s215] sm:$0x1]
      %v252 = vlaneseq
      %v253 = vshrl.u32 %v252, 7
      %v254 = vsub.s32 0, %v253
      %v255 = vrot.slane %v250, %v254
      %v259 = vunpack.c.l.b16 %v232
      %v260 = vunpack.c.l.b16 %v233
      %v261 = vpack.c.b16 %v260, %v259
      %v278 = vunpack.c.l.b16 %v234
      %v279 = vunpack.c.l.b16 %v235
      %v280 = vunpack.c.l.b16 %v236
      %v281 = vunpack.c.l.b16 %v237
      %v282 = vunpack.c.l.b16 %v238
      %v283 = vunpack.c.l.b16 %v239
      %v284 = vunpack.c.l.b16 %v240
      %v285 = vunpack.c.l.b16 %v241
      %v286 = vunpack.c.l.b16 %v242
      %v287 = vunpack.c.l.b16 %v243
      %v288 = vunpack.c.l.b16 %v244
      %v289 = vunpack.c.l.b16 %v245
      %v290 = vunpack.c.l.b16 %v246
      %v291 = vunpack.c.l.b16 %v247
      %v292 = vunpack.c.l.b16 %v248
      %v293 = vunpack.c.l.b16 %v249
      %v294 = vpack.c.b16 %v279, %v278
      %v295 = vpack.c.b16 %v281, %v280
      %v296 = vpack.c.b16 %v283, %v282
      %v297 = vpack.c.b16 %v285, %v284
      %v298 = vpack.c.b16 %v287, %v286
      %v299 = vpack.c.b16 %v289, %v288
      %v300 = vpack.c.b16 %v291, %v290
      %v301 = vpack.c.b16 %v293, %v292
      %vm302 = vcmask 261120
      %v304 = vsel %vm302, %v261, 0
      %v307 = vsel %vm302, %v294, 0
      %v310 = vsel %vm302, %v295, 0
      %v313 = vsel %vm302, %v296, 0
      %v316 = vsel %vm302, %v297, 0
      %v319 = vsel %vm302, %v298, 0
      %v322 = vsel %vm302, %v299, 0
      %v325 = vsel %vm302, %v300, 0
      %v328 = vsel %vm302, %v301, 0
      %330 = vmatprep.subr.bf16.mxu0 0
      %331 = vmatpush1.bf16.xpose.msra.mxu0 %v307
      %332 = vmatprep.subr.bf16.mxu0 0
      %333 = vmatpush1.bf16.xpose.msra.mxu0 %v310
      %334 = vmatprep.subr.bf16.mxu0 0
      %335 = vmatpush1.bf16.xpose.msra.mxu0 %v313
      %336 = vmatprep.subr.bf16.mxu0 0
      %337 = vmatpush1.bf16.xpose.msra.mxu0 %v316
      %338 = vmatprep.subr.bf16.mxu0 0
      %339 = vmatpush1.bf16.xpose.msra.mxu0 %v319
      %340 = vmatprep.subr.bf16.mxu0 0
      %341 = vmatpush1.bf16.xpose.msra.mxu0 %v322
      %342 = vmatprep.subr.bf16.mxu0 0
      %343 = vmatpush1.bf16.xpose.msra.mxu0 %v325
      %344 = vmatprep.subr.bf16.mxu0 0
      %345 = vmatpush1.bf16.xpose.msra.mxu0 %v328
      %346 = vmatprep.subr.bf16.mxu0 0
      %347 = vmatpush1.bf16.xpose.msra.mxu0 0
      %348 = vmatprep.subr.bf16.mxu0 0
      %349 = vmatpush1.bf16.xpose.msra.mxu0 0
      %350 = vmatprep.subr.bf16.mxu0 0
      %351 = vmatpush1.bf16.xpose.msra.mxu0 0
      %352 = vmatprep.subr.bf16.mxu0 0
      %353 = vmatpush1.bf16.xpose.msra.mxu0 0
      %354 = vmatprep.subr.bf16.mxu0 0
      %355 = vmatpush1.bf16.xpose.msra.mxu0 0
      %356 = vmatprep.subr.bf16.mxu0 0
      %357 = vmatpush1.bf16.xpose.msra.mxu0 0
      %358 = vmatprep.subr.bf16.mxu0 0
      %359 = vmatpush1.bf16.xpose.msra.mxu0 0
      %360 = vmatprep.subr.bf16.mxu0 0
      %361 = vmatpush1.bf16.xpose.msra.mxu0 0
      %362 = vmatprep.mubr.bf16.mxu0 0
      %363 = vmatmul.mubr.bf16.gmra.mrb[0].mxu0 %v304
      %v364 = vpop.f32.mrb[0].mxu0
      %v365 = vadd.f32 %v255, %v364
      %v366 = vpop.f32.mrb[0].mxu0
      %v367 = vpop.f32.mrb[0].mxu0
      %v368 = vadd.f32 %v255, %v367
      %v369 = vpop.f32.mrb[0].mxu0
      %370 = vdwg.mxu0
      %v371 = vld [vmem:[#allocation2] sm:$0xff]
      %v372 = vld [vmem:[#allocation2 + $0x8] sm:$0xff]
      %373 = vmax.xlane.f32.xlu0 %v365
      %v374 = vpop.xlane.xlu0 %373
      %375 = vmax.xlane.f32.xlu0 %v368
      %v376 = vpop.xlane.xlu0 %375
      %v377 = vmax.f32 %v371, %v374
      %v378 = vmax.f32 %v372, %v376
      %v379 = vld [vmem:[#allocation3] sm:$0xff]
      %v380 = vld [vmem:[#allocation3 + $0x8] sm:$0xff]
      %v381 = vsub.f32 %v371, %v377
      %v382 = vsub.f32 %v372, %v378
      %v383 = vmul.f32 %v381, 1.442695
      %v384 = vpow.pop %v383
      %v385 = vmul.f32 %v382, 1.442695
      %v386 = vpow.pop %v385
      %v387 = vmul.f32 %v379, %v384
      %v388 = vmul.f32 %v380, %v386
      %390 = vset.pattern.permute.xlu0 0
      %391 = vperm.xlu0 %390, %v377
      %v392 = vpop.permute.xlu0 %391
      %395 = vset.pattern.permute.xlu0 0
      %396 = vperm.xlu0 %395, %v378
      %v397 = vpop.permute.xlu0 %396
      %v399 = vsub.f32 %v365, %v392
      %v400 = vsub.f32 %v368, %v397
      %v401 = vmul.f32 %v399, 1.442695
      %v402 = vpow.pop %v401
      %v403 = vmul.f32 %v400, 1.442695
      %v404 = vpow.pop %v403
      %405 = vadd.xlane.f32.xlu0 %v402
      %v406 = vpop.xlane.xlu0 %405
      %407 = vadd.xlane.f32.xlu0 %v404
      %v408 = vpop.xlane.xlu0 %407
      %v409 = vadd.f32 %v387, %v406
      %v410 = vadd.f32 %v388, %v408
      %vm411 = vcmask 7168
      %412 = vst.msk [vmem:[#allocation3] sm:$0xff] %vm411, %v409
      %413 = vst.msk [vmem:[#allocation3 + $0x8] sm:$0xff] %vm411, %v410
      %414 = vst.msk [vmem:[#allocation2] sm:$0xff] %vm411, %v377
      %415 = vst.msk [vmem:[#allocation2 + $0x8] sm:$0xff] %vm411, %v378
      %p416 = scmp.eq.s32.totalorder %s19, 1
      // Predicated region
      $region37: #{mlm_task_layer.2} parent=31 // pred_check
        %p417 = pneg %p416
      $region38: #{mlm_task_layer.2} parent=31 // pred_check_branch
        %419 = sbr.rel (%p417) target = $region40
      $region39: #{mlm_task_layer.2} parent=31 // pred_region
        %v420 = vld [vmem:[#allocation2] sm:$0xff]
        %v421 = vld [vmem:[#allocation2 + $0x8] sm:$0xff]
        %v422 = vld [vmem:[#allocation3] sm:$0xff]
        %v423 = vld [vmem:[#allocation3 + $0x8] sm:$0xff]
        %v424 = vlog2.pop %v422
        %v425 = vmul.f32 %v424, 0.6931472
        %v426 = vlog2.pop %v423
        %v427 = vmul.f32 %v426, 0.6931472
        %v428 = vadd.f32 %v420, %v425
        %v429 = vadd.f32 %v421, %v427
        %430 = vst.msk [vmem:[%s220] sm:$0xff] %vm411, %v428
        %431 = vst.msk [vmem:[%s220 + $0x8] sm:$0xff] %vm411, %v429
      $region40: #{mlm_task_layer.2} parent=31 // pred_fallthru
        _
      %s432 = smul.u32 2, %s18
      %p433 = scmp.lt.s32.totalorder %s432, 3
      %s434 = scalar_select %p433, %s432, 3
      %s435 = smul.addr %s434, 8
      %s436 = scalar_lea.vmem %s3, %s435
      // Predicated region
      $region41: #{mlm_task_layer.2} parent=31 // pred_check
        %p437 = pneg %p122
      $region42: #{mlm_task_layer.2} parent=31 // pred_check_branch
        %439 = sbr.rel (%p437) target = $region44
      $region43: #{mlm_task_layer.2} parent=31 // pred_region
        %s440 = smul.u32 2, %s18
      $region44: #{mlm_task_layer.2} parent=31 // pred_fallthru
        _
    $region32: #{mlm_task_layer.2} parent=5 // pred_fallthru
      _
    %p441 = scmp.le.s32.totalorder 2, %s9
    // Predicated region
    $region45: #{mlm_task_layer.2} parent=5 // pred_check
      %p442 = pneg %p441
    $region46: #{mlm_task_layer.2} parent=5 // pred_check_branch
      %444 = sbr.rel (%p442) target = $region48
    $region47: #{mlm_task_layer.2} parent=5 // pred_region
      %s445 = ssub.s32 %s9, 2
      // Predicated region
      $region49: #{mlm_task_layer.2} parent=47 // pred_check
        %p446 = pneg %p128
      $region50: #{mlm_task_layer.2} parent=47 // pred_check_branch
        %448 = sbr.rel (%p446) target = $region52
      $region51: #{mlm_task_layer.2} parent=47 // pred_region
        %s449 = smul.u32 2, %s20
        %p450 = scmp.lt.s32.totalorder %s449, 3
        %s451 = scalar_select %p450, %s449, 3
        %s452 = smul.addr %s451, 8
        %s453 = scalar_lea.vmem %s3, %s452
      $region52: #{mlm_task_layer.2} parent=47 // pred_fallthru
        _
    $region48: #{mlm_task_layer.2} parent=5 // pred_fallthru
      _
  $region6: #{mlm_task_layer.2} parent=0 // loop_footer
    %s13 = sadd.s32 1, %s9
  $region7: #{mlm_task_layer.2} parent=0 // loop_footer_branch
    %8 = sbr.rel target = $region3
  $region8: #{mlm_task_layer.2} parent=0 // loop_exit
    _

</llo_original>
